<compile_context>
chip_gen: v6e
topology: v6e:2x2x1
jax: 0.10.0
libtpu: 0.0.40
codegen_flags: <defaults>
</compile_context>

<pallas_src>
import math

import jax
import jax.numpy as jnp
from jax.experimental import pallas as pl
from jax.experimental.pallas import tpu as pltpu


def _round_up(x, m):
    return ((x + m - 1) // m) * m


def _num_tensorcores():
    """2 on v7x (megacore per-chip TCs), 1 on v5e/v6e; safe fallback 1."""
    try:
        kind = jax.devices()[0].device_kind.lower()
    except Exception:
        return 1
    return 2 if "v7" in kind else 1


def _vmem_capacity_bytes():
    try:
        return int(pltpu.get_tpu_info().vmem_capacity_bytes)
    except Exception:
        return 64 * 1024 * 1024  # conservative (v7x per-TC VMEM)


# ---------------- irreps helpers (parameter-setup glue, plain JAX) ----------------
def irreps_dim(irreps):
    return sum(mul * (2 * l + 1) for mul, (l, p) in irreps)


def irreps_slices(irreps):
    slices, start = [], 0
    for mul, (l, p) in irreps:
        d = mul * (2 * l + 1)
        slices.append((start, start + d))
        start += d
    return slices


def scalar_even_mask(irreps):
    """1.0 on 0e slices, 0.0 elsewhere — the only slices that carry a bias."""
    parts = []
    for mul, (l, p) in irreps:
        d = mul * (2 * l + 1)
        val = 1.0 if (l == 0 and p == 1) else 0.0
        parts.append(jnp.full((d,), val, jnp.float32))
    return jnp.concatenate(parts)


def build_linear_rs_params(key, irreps_in, irreps_out, rescale=True, use_bias=True):
    """Deterministically build the dense-equivalent weight/bias of LinearRS.

    irreps are lists of (mul, (l, parity)) with parity in {+1 ('e'), -1 ('o')}.
    Returns W (dim_in, dim_out) f32 and bias (dim_out,) f32.
    """
    dim_in = irreps_dim(irreps_in)
    dim_out = irreps_dim(irreps_out)
    in_slices = irreps_slices(irreps_in)
    out_slices = irreps_slices(irreps_out)

    # instructions (i_in1, i_out): only matching irreps connect since in2 = 1x0e.
    instructions = [
        (i1, io)
        for i1, (_, ir1) in enumerate(irreps_in)
        for io, (_, iro) in enumerate(irreps_out)
        if ir1 == iro
    ]

    # fan_in per output slice for 'uvw': mul_in1 * mul_in2 = mul_in1 (mul_in2 = 1).
    fan_in = {}
    for i1, io in instructions:
        fan_in[io] = fan_in.get(io, 0) + irreps_in[i1][0]

    W = jnp.zeros((dim_in, dim_out), dtype=jnp.float32)
    keys = jax.random.split(key, max(len(instructions), 1))
    for k, (i1, io) in zip(keys, instructions):
        mul_in, (l, _p) = irreps_in[i1]
        mul_out, _ = irreps_out[io]
        dl = 2 * l + 1
        sqrt_k = 1.0 / math.sqrt(fan_in[io]) if rescale else 1.0
        w = jax.random.normal(k, (mul_in, mul_out), dtype=jnp.float32) * sqrt_k
        # expand (mul_in, mul_out) -> (mul_in*dl, mul_out*dl) with delta_{m,m'}
        block = jnp.kron(w, jnp.eye(dl, dtype=jnp.float32))
        (si0, si1), (so0, so1) = in_slices[i1], out_slices[io]
        W = W.at[si0:si1, so0:so1].add(block)

    bias = jnp.zeros((dim_out,), dtype=jnp.float32)
    if use_bias:
        # zero-initialized (as in the module); mask enforces "0e slices only" even if
        # parameters are later trained/loaded.
        bias = bias * scalar_even_mask(irreps_out)
    return W, bias


def prepare_linear_rs_params(W, bias, irreps_out, compute_dtype=jnp.bfloat16):
    """One-time cast/layout of parameters for the kernel (no per-call pad/cast)."""
    w_k = W.astype(compute_dtype)                                   # (dim_in, dim_out)
    b_k = (bias.astype(jnp.float32) * scalar_even_mask(irreps_out)) # enforce 0e-only
    b_k = b_k.reshape(1, -1)                                        # (1, dim_out)
    return w_k, b_k


# ---------------- Pallas kernel: matmul + bias (the hot path) ----------------
def _linear_rs_kernel(x_ref, w_ref, b_ref, o_ref):
    # Cast x to the weight dtype (bf16) in-kernel: MXU-native, no extra HBM pass.
    x = x_ref[...].astype(w_ref.dtype)
    acc = jnp.dot(x, w_ref[...], preferred_element_type=jnp.float32)
    o_ref[...] = (acc + b_ref[...]).astype(o_ref.dtype)


def linear_rs(x, w_kernel, bias_kernel, *, tm=512, out_dtype=None):
    """Apply LinearRS.  x: (..., dim_in) -> (..., dim_out).

    w_kernel: (dim_in, dim_out) pre-cast (bf16) weight from prepare_linear_rs_params.
    bias_kernel: (1, dim_out) f32 bias (0e-masked) from prepare_linear_rs_params.
    """
    orig_shape = x.shape
    dim_in = x.shape[-1]
    dim_out = w_kernel.shape[1]
    if out_dtype is None:
        out_dtype = x.dtype  # pass jnp.bfloat16 to halve writeback if downstream allows

    x2 = x.reshape(-1, dim_in)          # pure reshape, no copy
    n_rows = x2.shape[0]

    # Row tile: big (amortizes ~0.35 us per grid step, better HBM streaming), multiple
    # of 8 sublanes.  Only split for megacore on chips that actually have 2 TCs, and
    # then target >=4 grid steps so each core's pipeline overlaps DMA with compute.
    tm_eff = int(min(tm, _round_up(max(n_rows, 1), 8)))
    if _num_tensorcores() >= 2 and n_rows >= 32:
        tm_eff = int(min(tm_eff, max(8, _round_up(pl.cdiv(n_rows, 4), 8))))
    grid = (pl.cdiv(n_rows, tm_eff),)   # ragged last block handled by Pallas

    # VMEM budget from actual tile bytes (W/bias single-buffered), with headroom,
    # floor 16 MiB, capped below the chip's physical VMEM.
    xb = jnp.dtype(x.dtype).itemsize
    wb = jnp.dtype(w_kernel.dtype).itemsize
    ob = jnp.dtype(out_dtype).itemsize
    tile_bytes = (2 * tm_eff * dim_in * xb        # double-buffered x tiles
                  + 2 * tm_eff * dim_out * ob     # double-buffered out tiles
                  + dim_in * dim_out * wb         # W (Buffered(1), grid-invariant)
                  + dim_out * 4)                  # bias (Buffered(1))
    vmem_cap = _vmem_capacity_bytes()
    vmem_limit = int(min(int(0.75 * vmem_cap), max(4 * tile_bytes, 16 * 1024 * 1024)))

    cost = pl.CostEstimate(
        flops=2 * n_rows * dim_in * dim_out,
        transcendentals=0,
        bytes_accessed=(n_rows * dim_in * xb + dim_in * dim_out * wb
                        + dim_out * 4 + n_rows * dim_out * ob),
    )

    out2 = pl.pallas_call(
        _linear_rs_kernel,
        out_shape=jax.ShapeDtypeStruct((n_rows, dim_out), out_dtype),
        grid_spec=pltpu.PrefetchScalarGridSpec(
            num_scalar_prefetch=0,
            grid=grid,
            in_specs=[
                # last dim == full array dim => legal without lane padding
                pl.BlockSpec((tm_eff, dim_in), lambda i: (i, 0)),
                pl.BlockSpec((dim_in, dim_out), lambda i: (0, 0),
                             pipeline_mode=pl.Buffered(1)),
                pl.BlockSpec((1, dim_out), lambda i: (0, 0),
                             pipeline_mode=pl.Buffered(1)),
            ],
            out_specs=pl.BlockSpec((tm_eff, dim_out), lambda i: (i, 0)),
        ),
        compiler_params=pltpu.CompilerParams(
            dimension_semantics=("parallel",),
            vmem_limit_bytes=vmem_limit,
        ),
        cost_estimate=cost,
    )(x2, w_kernel, bias_kernel)

    return out2.reshape(*orig_shape[:-1], dim_out)


if __name__ == "__main__":
    # irreps_in = "8x0e + 4x1e"  (dim 8 + 12 = 20)
    # irreps_out = "16x0e + 8x1e" (dim 16 + 24 = 40)
    irreps_in = [(8, (0, 1)), (4, (1, 1))]
    irreps_out = [(16, (0, 1)), (8, (1, 1))]

    key = jax.random.PRNGKey(0)
    k_w, k_x = jax.random.split(key)

    W, bias = build_linear_rs_params(k_w, irreps_in, irreps_out, rescale=True, use_bias=True)
    w_kernel, bias_kernel = prepare_linear_rs_params(W, bias, irreps_out,
                                                     compute_dtype=jnp.bfloat16)

    B, T = 2, 8
    dim_in = irreps_dim(irreps_in)
    dim_out = irreps_dim(irreps_out)
    x = jax.random.normal(k_x, (B, T, dim_in), dtype=jnp.float32)

    out = linear_rs(x, w_kernel, bias_kernel)
    out = jax.block_until_ready(out)
    assert out.shape == (B, T, dim_out)

    # reference mirroring the kernel's bf16-input / f32-accumulate matmul
    x2 = x.reshape(-1, dim_in)
    ref_bf16 = jnp.dot(x2.astype(jnp.bfloat16), W.astype(jnp.bfloat16),
                       preferred_element_type=jnp.float32) + bias
    ref_bf16 = ref_bf16.reshape(B, T, dim_out)
    assert jnp.allclose(out, ref_bf16, atol=1e-3, rtol=1e-3)

    # looser check against the exact f32 forward of the module
    ref_f32 = (x2 @ W + bias).reshape(B, T, dim_out)
    assert jnp.allclose(out, ref_f32, atol=5e-2, rtol=5e-2)

    print("KERNEL_OK")
</pallas_src>

<mosaic_0001>
module attributes {stable_mosaic.version = 11 : i64} {
  func.func @_linear_rs_kernel(%arg0: i32, %arg1: memref<16x20xf32, #tpu.memory_space<vmem>>, %arg2: memref<20x40xbf16, #tpu.memory_space<vmem>>, %arg3: memref<1x40xf32, #tpu.memory_space<vmem>>, %arg4: memref<16x40xf32, #tpu.memory_space<vmem>>) attributes {dimension_semantics = [#tpu.dimension_semantics<parallel>], iteration_bounds = array<i64: 1>, scalar_prefetch = 0 : i64, scratch_operands = 0 : i64, tpu.core_type = #tpu.core_type<tc>, window_params = [{transform_indices = @transform_0, window_bounds = array<i64: 16, 20>}, {pipeline_mode = #tpu.pipeline_mode<synchronous>, transform_indices = @transform_1, window_bounds = array<i64: 20, 40>}, {pipeline_mode = #tpu.pipeline_mode<synchronous>, transform_indices = @transform_2, window_bounds = array<i64: 1, 40>}, {transform_indices = @transform_3, window_bounds = array<i64: 16, 40>}]} {
    %c0 = arith.constant 0 : index
    %c0_0 = arith.constant 0 : index
    %0 = vector.load %arg1[%c0, %c0_0] : memref<16x20xf32, #tpu.memory_space<vmem>>, vector<16x20xf32>
    %1 = arith.truncf %0 : vector<16x20xf32> to vector<16x20xbf16>
    %c0_1 = arith.constant 0 : index
    %c0_2 = arith.constant 0 : index
    %2 = vector.load %arg2[%c0_1, %c0_2] : memref<20x40xbf16, #tpu.memory_space<vmem>>, vector<20x40xbf16>
    %cst = arith.constant dense<0.000000e+00> : vector<16x40xf32>
    %3 = tpu.matmul %1, %2, %cst {dimension_numbers = #tpu.dot_dimension_numbers<[1], [0], [0], [1], [0, 0, 1, 1], [], []>} : vector<16x20xbf16>, vector<20x40xbf16>, vector<16x40xf32> -> vector<16x40xf32>
    %c0_3 = arith.constant 0 : index
    %c0_4 = arith.constant 0 : index
    %4 = vector.load %arg3[%c0_3, %c0_4] : memref<1x40xf32, #tpu.memory_space<vmem>>, vector<1x40xf32>
    %5 = vector.broadcast %4 : vector<1x40xf32> to vector<16x40xf32>
    %6 = arith.addf %3, %5 : vector<16x40xf32>
    %c0_5 = arith.constant 0 : index
    %c0_6 = arith.constant 0 : index
    %7 = vector.load %arg4[%c0_5, %c0_6] : memref<16x40xf32, #tpu.memory_space<vmem>>, vector<16x40xf32>
    tpu.vector_store %arg4[%c0_5, %c0_6], %6 {strides = array<i32>} : memref<16x40xf32, #tpu.memory_space<vmem>>, vector<16x40xf32>,
    return
  }
  func.func @transform_0(%arg0: i32) -> (i32, i32) {
    %c0_i32 = arith.constant 0 : i32
    %c0_i32_0 = arith.constant 0 : i32
    return %arg0, %c0_i32 : i32, i32
  }
  func.func @transform_1(%arg0: i32) -> (i32, i32) {
    %c0_i32 = arith.constant 0 : i32
    %c0_i32_0 = arith.constant 0 : i32
    %c0_i32_1 = arith.constant 0 : i32
    return %c0_i32, %c0_i32_0 : i32, i32
  }
  func.func @transform_2(%arg0: i32) -> (i32, i32) {
    %c0_i32 = arith.constant 0 : i32
    %c0_i32_0 = arith.constant 0 : i32
    %c0_i32_1 = arith.constant 0 : i32
    return %c0_i32, %c0_i32_0 : i32, i32
  }
  func.func @transform_3(%arg0: i32) -> (i32, i32) {
    %c0_i32 = arith.constant 0 : i32
    %c0_i32_0 = arith.constant 0 : i32
    return %arg0, %c0_i32 : i32, i32
  }
}

</mosaic_0001>

<llo_original>
// kernel: tpu_custom_call.1
$region0: #{tpu_custom_call.1}
  #allocation0 [shape = 'u32[]', space=smem, size = 0x4, offset = 0x4, fixed_abs, tag = 'smem constant byte address 0x4 - core index']
  #allocation1 [shape = 'u32[144,128]{1,0:T(1,128)}', space=vmem, size = 0x12000, scoped, tag = 'internal scratch']
  %s0 = inlined_call_operand.hbm [shape: f32[16,20], index: 0, kind: input, shape index: {}]
  %s1 = inlined_call_operand.hbm [shape: bf16[20,40], index: 1, kind: input, shape index: {}]
  %s2 = inlined_call_operand.vmem [shape: f32[1,40], index: 2, kind: input, shape index: {}]
  %s3 = inlined_call_operand.hbm [shape: f32[16,40], index: 3, kind: output, shape index: {}]
  %s4 = sld [smem:[#allocation0]]
  $region30: #{tpu_custom_call.1} parent=0
    _
  %s6 = ssub.s32 1, %s4
  %s7 = scalar_select 0, %s6, %s4
  $region1: #{tpu_custom_call.1} parent=0
    #allocation2 [shape = 'u8[8192]{0}', space=vmem, size = 0x2000, scoped, tag = 'input window, operand 0, single buffered']
    #allocation3 [shape = 's32[1]{0}', space=sflag, size = 0x4, scoped, tag = 'scoped memory for tpu_custom_call.1']
    #allocation4 [shape = 's32[1]{0}', space=sflag, size = 0x4, scoped, tag = 'scoped memory for tpu_custom_call.1']
    #allocation5 [shape = 'u8[6144]{0}', space=vmem, size = 0x1800, scoped, tag = 'input window, operand 1, single buffered']
    #allocation6 [shape = 's32[1]{0}', space=sflag, size = 0x4, scoped, tag = 'scoped memory for tpu_custom_call.1']
    #allocation7 [shape = 'u8[8192]{0}', space=vmem, size = 0x2000, scoped, tag = 'output window, operand 0, single buffered']
    %8 = vsyncpa [#allocation3], 0
    %9 = vsyncpa [#allocation6], 0
    %10 = vsyncpa [#allocation4], 0
    // Predicated region
    $region2: #{tpu_custom_call.1} parent=1 // pred_check
      _
    $region3: #{tpu_custom_call.1} parent=1 // pred_check_branch
      %12 = sbr.rel (0) target = $region5
    $region4: #{tpu_custom_call.1} parent=1 // pred_region
      %s14 = ssub.s32 256, 256
      %15 = vsyncadd [#allocation3], %s14
      %s16 = sshll.u32 [#allocation2], 4
      %s17 = int_to_ptr.vmem [resolvable:$true] %s16
      %22 = dma.hbm_to_vmem [thread:$0]  %s0, 256, %s17, [#allocation3], 128, 128, 8
    $region5: #{tpu_custom_call.1} parent=1 // pred_fallthru
      _
    // Predicated region
    $region6: #{tpu_custom_call.1} parent=1 // pred_check
      _
    $region7: #{tpu_custom_call.1} parent=1 // pred_check_branch
      %24 = sbr.rel (0) target = $region9
    $region8: #{tpu_custom_call.1} parent=1 // pred_region
      %s26 = ssub.s32 192, 192
      %27 = vsyncadd [#allocation6], %s26
      %s28 = sshll.u32 [#allocation5], 4
      %s29 = int_to_ptr.vmem [resolvable:$true] %s28
      %34 = dma.hbm_to_vmem [thread:$0]  %s1, 192, %s29, [#allocation6], 64, 64, 4
    $region9: #{tpu_custom_call.1} parent=1 // pred_fallthru
      _
    // Predicated region
    $region10: #{tpu_custom_call.1} parent=1 // pred_check
      _
    $region11: #{tpu_custom_call.1} parent=1 // pred_check_branch
      %36 = sbr.rel (0) target = $region13
    $region12: #{tpu_custom_call.1} parent=1 // pred_region
      _
    $region13: #{tpu_custom_call.1} parent=1 // pred_fallthru
      _
    // Predicated region
    $region14: #{tpu_custom_call.1} parent=1 // pred_check
      _
    $region15: #{tpu_custom_call.1} parent=1 // pred_check_branch
      %38 = sbr.rel (0) target = $region17
    $region16: #{tpu_custom_call.1} parent=1 // pred_region
      %39 = dma.done [#allocation3], 256
    $region17: #{tpu_custom_call.1} parent=1 // pred_fallthru
      _
    // Predicated region
    $region18: #{tpu_custom_call.1} parent=1 // pred_check
      _
    $region19: #{tpu_custom_call.1} parent=1 // pred_check_branch
      %41 = sbr.rel (0) target = $region21
    $region20: #{tpu_custom_call.1} parent=1 // pred_region
      %42 = dma.done [#allocation6], 192
    $region21: #{tpu_custom_call.1} parent=1 // pred_fallthru
      _
    %v44 = vld [vmem:[#allocation2] sm:$0xff]
    %v45 = vld [vmem:[#allocation2 + $0x8] sm:$0xff]
    %v46 = vpack.c.bf16 %v45, %v44
    %v47 = vld [vmem:[#allocation5] sm:$0xf]
    %v48 = vld [vmem:[#allocation5 + $0x4] sm:$0xf]
    %v49 = vld [vmem:[#allocation5 + $0x8] sm:$0x3]
    %v50 = vld [vmem:[%s2] sm:$0x1]
    %v52 = vlaneseq
    %v53 = vshrl.u32 %v52, 7
    %v54 = vsub.s32 0, %v53
    %v55 = vrot.slane %v50, %v54
    %v60 = vunpack.c.l.b16 %v47
    %v61 = vunpack.c.l.b16 %v48
    %v62 = vunpack.c.l.b16 %v49
    %v63 = vpack.c.b16 %v61, %v60
    %v64 = vpack.c.b16 %v62, %v62
    %vm66 = vcmask 162816
    %v68 = vsel %vm66, %v46, 0
    %vm70 = vcmask 1041408
    %v72 = vsel %vm70, %v64, 0
    %74 = vmatprep.subr.bf16.mxu0 0
    %75 = vmatpush1.bf16.msra.mxu0 0
    %76 = vmatprep.subr.bf16.mxu0 0
    %77 = vmatpush1.bf16.msra.mxu0 0
    %78 = vmatprep.subr.bf16.mxu0 0
    %79 = vmatpush1.bf16.msra.mxu0 0
    %80 = vmatprep.subr.bf16.mxu0 0
    %81 = vmatpush1.bf16.msra.mxu0 0
    %82 = vmatprep.subr.bf16.mxu0 0
    %83 = vmatpush1.bf16.msra.mxu0 0
    %84 = vmatprep.subr.bf16.mxu0 0
    %85 = vmatpush1.bf16.msra.mxu0 0
    %86 = vmatprep.subr.bf16.mxu0 0
    %87 = vmatpush1.bf16.msra.mxu0 %v72
    %88 = vmatprep.subr.bf16.mxu0 0
    %89 = vmatpush1.bf16.msra.mxu0 %v63
    %90 = vmatprep.subr.bf16.mxu0 0
    %91 = vmatpush2.bf16.msra.mxu0 0
    %92 = vmatprep.subr.bf16.mxu0 0
    %93 = vmatpush2.bf16.msra.mxu0 0
    %94 = vmatprep.subr.bf16.mxu0 0
    %95 = vmatpush2.bf16.msra.mxu0 0
    %96 = vmatprep.subr.bf16.mxu0 0
    %97 = vmatpush2.bf16.msra.mxu0 0
    %98 = vmatprep.subr.bf16.mxu0 0
    %99 = vmatpush2.bf16.msra.mxu0 0
    %100 = vmatprep.subr.bf16.mxu0 0
    %101 = vmatpush2.bf16.msra.mxu0 0
    %102 = vmatprep.subr.bf16.mxu0 0
    %103 = vmatpush2.bf16.msra.mxu0 0
    %104 = vmatprep.subr.bf16.mxu0 0
    %105 = vmatpush2.bf16.msra.mxu0 0
    %106 = vmatprep.mubr.bf16.mxu0 0
    %107 = vmatmul.mubr.bf16.gmra.mxu0 %v68
    %v108 = vpop.f32.mrf.mxu0
    %v109 = vadd.f32 %v55, %v108
    %v110 = vpop.f32.mrf.mxu0
    %v111 = vpop.f32.mrf.mxu0
    %v112 = vadd.f32 %v55, %v111
    %v113 = vpop.f32.mrf.mxu0
    %114 = vdwg.mxu0
    %vm115 = vcmask 326656
    %116 = vst.msk [vmem:[#allocation7] sm:$0xff] %vm115, %v109
    %117 = vst.msk [vmem:[#allocation7 + $0x8] sm:$0xff] %vm115, %v112
    // Predicated region
    $region22: #{tpu_custom_call.1} parent=1 // pred_check
      _
    $region23: #{tpu_custom_call.1} parent=1 // pred_check_branch
      %119 = sbr.rel (0) target = $region25
    $region24: #{tpu_custom_call.1} parent=1 // pred_region
      %s121 = ssub.s32 256, 256
      %122 = vsyncadd [#allocation4], %s121
      %s123 = sshll.u32 [#allocation7], 4
      %s124 = int_to_ptr.vmem [resolvable:$true] %s123
      %129 = dma.vmem_to_hbm [thread:$0]  %s124, 256, %s3, [#allocation4], 128, 128, 8
    $region25: #{tpu_custom_call.1} parent=1 // pred_fallthru
      _
    // Predicated region
    $region26: #{tpu_custom_call.1} parent=1 // pred_check
      _
    $region27: #{tpu_custom_call.1} parent=1 // pred_check_branch
      %131 = sbr.rel (0) target = $region29
    $region28: #{tpu_custom_call.1} parent=1 // pred_region
      %132 = dma.done [#allocation4], 256
    $region29: #{tpu_custom_call.1} parent=1 // pred_fallthru
      _
    %133 = vsyncpa [#allocation3], 1
    %134 = vsyncpa [#allocation6], 1
    %135 = vsyncpa [#allocation4], 1

</llo_original>
